<compile_context>
chip_gen: v6e
topology: v6e:2x2x1
jax: 0.10.0
libtpu: 0.0.40
codegen_flags: <defaults>
</compile_context>

<pallas_src>
import jax
import jax.numpy as jnp
from jax.experimental import pallas as pl
from jax.experimental.pallas import tpu as pltpu


# --------------------------------------------------------------------------- #
# Kernel A: fused kNN-ranking distance + W-split projection
#   grid = (B, N // TM)
#   in : x row-tile (1,TM,C), x full (1,N,C), Wd=(W_top-W_bot) (C,Cout),
#        Wb=W_bot (C,Cout), bias (1,Cout) f32
#   out: d (1,TM,N) f32, a (1,TM,Cout), c (1,TM,Cout)
# --------------------------------------------------------------------------- #
def _edgeconv_pre_kernel(xt_ref, xf_ref, wd_ref, wb_ref, b_ref, d_ref, a_ref, c_ref):
    xt = xt_ref[0]                                              # (TM, C)
    xf = xf_ref[0]                                              # (N, C)
    # d[i, j] = ||x_j||^2 - 2 x_i.x_j  (per-row ||x_i||^2 dropped: constant per row,
    # top_k over j is unchanged).
    xf32 = xf.astype(jnp.float32)
    col_sq = jnp.sum(xf32 * xf32, axis=-1, keepdims=True)       # (N, 1)
    inner = jax.lax.dot_general(                                 # x_tile @ x_full.T
        xt, xf, dimension_numbers=(((1,), (1,)), ((), ())),
        preferred_element_type=jnp.float32)                      # (TM, N)
    d_ref[0] = jnp.transpose(col_sq) - 2.0 * inner
    # W-split linear:  a = x @ (W_top - W_bot) + b ,  c = x @ W_bot
    a = jnp.dot(xt, wd_ref[...], preferred_element_type=jnp.float32) + b_ref[...]
    c = jnp.dot(xt, wb_ref[...], preferred_element_type=jnp.float32)
    a_ref[0] = a.astype(a_ref.dtype)
    c_ref[0] = c.astype(c_ref.dtype)


def edgeconv_pre(x, wd, wb, bias, *, tm):
    B, N, C = x.shape
    Cout = wd.shape[1]
    return pl.pallas_call(
        _edgeconv_pre_kernel,
        out_shape=(
            jax.ShapeDtypeStruct((B, N, N), jnp.float32),
            jax.ShapeDtypeStruct((B, N, Cout), x.dtype),
            jax.ShapeDtypeStruct((B, N, Cout), x.dtype),
        ),
        grid=(B, N // tm),
        in_specs=[
            pl.BlockSpec((1, tm, C), lambda b, m: (b, m, 0)),
            pl.BlockSpec((1, N, C), lambda b, m: (b, 0, 0)),
            pl.BlockSpec((C, Cout), lambda b, m: (0, 0)),
            pl.BlockSpec((C, Cout), lambda b, m: (0, 0)),
            pl.BlockSpec((1, Cout), lambda b, m: (0, 0)),
        ],
        out_specs=(
            pl.BlockSpec((1, tm, N), lambda b, m: (b, m, 0)),
            pl.BlockSpec((1, tm, Cout), lambda b, m: (b, m, 0)),
            pl.BlockSpec((1, tm, Cout), lambda b, m: (b, m, 0)),
        ),
        compiler_params=pltpu.CompilerParams(
            dimension_semantics=("parallel", "parallel")),
    )(x, x, wd, wb, bias)


# --------------------------------------------------------------------------- #
# Kernel B: out_i = a_i + max_k c_gathered[i, k, :]        (conv1 / conv2)
# --------------------------------------------------------------------------- #
def _nbr_max_add_kernel(a_ref, g_ref, o_ref):
    m = jnp.max(g_ref[0].astype(jnp.float32), axis=1)           # (TN, Cout)
    o_ref[0] = (a_ref[0].astype(jnp.float32) + m).astype(o_ref.dtype)


def nbr_max_add(a, g, *, tn):
    B, N, Cout = a.shape
    K = g.shape[2]
    return pl.pallas_call(
        _nbr_max_add_kernel,
        out_shape=jax.ShapeDtypeStruct((B, N, Cout), a.dtype),
        grid=(B, N // tn),
        in_specs=[
            pl.BlockSpec((1, tn, Cout), lambda b, n: (b, n, 0)),
            pl.BlockSpec((1, tn, K, Cout), lambda b, n: (b, n, 0, 0)),
        ],
        out_specs=pl.BlockSpec((1, tn, Cout), lambda b, n: (b, n, 0)),
        compiler_params=pltpu.CompilerParams(
            dimension_semantics=("parallel", "parallel")),
    )(a, g)


# --------------------------------------------------------------------------- #
# Kernel B': conv3 variant with the global max-pool fused in.
#   Output-resident (1,1,Cout) accumulator across the (arbitrary) N-tile axis.
# --------------------------------------------------------------------------- #
def _nbr_max_add_pool_kernel(a_ref, g_ref, p_ref):
    m = jnp.max(g_ref[0].astype(jnp.float32), axis=1)           # (TN, Cout)
    out = a_ref[0].astype(jnp.float32) + m                      # per-point conv3 output
    tile_max = jnp.max(out, axis=0, keepdims=True)              # (1, Cout)

    @pl.when(pl.program_id(1) == 0)
    def _():
        p_ref[0] = tile_max.astype(p_ref.dtype)

    @pl.when(pl.program_id(1) != 0)
    def _():
        p_ref[0] = jnp.maximum(p_ref[0], tile_max.astype(p_ref.dtype))


def nbr_max_add_pool(a, g, *, tn):
    B, N, Cout = a.shape
    K = g.shape[2]
    pooled = pl.pallas_call(
        _nbr_max_add_pool_kernel,
        out_shape=jax.ShapeDtypeStruct((B, 1, Cout), a.dtype),
        grid=(B, N // tn),
        in_specs=[
            pl.BlockSpec((1, tn, Cout), lambda b, n: (b, n, 0)),
            pl.BlockSpec((1, tn, K, Cout), lambda b, n: (b, n, 0, 0)),
        ],
        out_specs=pl.BlockSpec((1, 1, Cout), lambda b, n: (b, 0, 0)),
        compiler_params=pltpu.CompilerParams(
            dimension_semantics=("parallel", "arbitrary")),
    )(a, g)
    return pooled.reshape(B, Cout)


# --------------------------------------------------------------------------- #
# Kernel C: classifier head fc1/ReLU/fc2/ReLU/fc3 on the pooled (B,256) features.
#   Final weight/bias are lane-padded to a multiple of 128 in the wrapper.
# --------------------------------------------------------------------------- #
def _classifier_kernel(p_ref, w1_ref, b1_ref, w2_ref, b2_ref, w3_ref, b3_ref, o_ref):
    h = jnp.dot(p_ref[...], w1_ref[...], preferred_element_type=jnp.float32) + b1_ref[...]
    h = jnp.maximum(h, 0.0).astype(w2_ref.dtype)
    h = jnp.dot(h, w2_ref[...], preferred_element_type=jnp.float32) + b2_ref[...]
    h = jnp.maximum(h, 0.0).astype(w3_ref.dtype)
    o_ref[...] = jnp.dot(h, w3_ref[...], preferred_element_type=jnp.float32) + b3_ref[...]


def classifier_head(pooled, w1, b1, w2, b2, w3p, b3p, num_classes):
    B = pooled.shape[0]
    ncp = w3p.shape[1]                                          # lane-padded width
    out = pl.pallas_call(
        _classifier_kernel,
        out_shape=jax.ShapeDtypeStruct((B, ncp), jnp.float32),
        grid=(1,),
        in_specs=[
            pl.BlockSpec(pooled.shape, lambda i: (0, 0)),
            pl.BlockSpec(w1.shape, lambda i: (0, 0)),
            pl.BlockSpec(b1.shape, lambda i: (0, 0)),
            pl.BlockSpec(w2.shape, lambda i: (0, 0)),
            pl.BlockSpec(b2.shape, lambda i: (0, 0)),
            pl.BlockSpec(w3p.shape, lambda i: (0, 0)),
            pl.BlockSpec(b3p.shape, lambda i: (0, 0)),
        ],
        out_specs=pl.BlockSpec((B, ncp), lambda i: (0, 0)),
        compiler_params=pltpu.CompilerParams(dimension_semantics=("arbitrary",)),
    )(pooled, w1, b1, w2, b2, w3p, b3p)
    return out[:, :num_classes]


# --------------------------------------------------------------------------- #
# Glue (plain JAX): kNN selection + gather of the projected features c
# --------------------------------------------------------------------------- #
def dynamic_edge_conv(x, wd, wb, bias, k, *, pool=False):
    _, N, _ = x.shape
    tm = min(N, 256)
    assert N % tm == 0
    d, a, c = edgeconv_pre(x, wd, wb, bias, tm=tm)
    # TODO(synk): top_k (data-dependent selection) and the neighbor gather stay in
    # JAX/XLA; an in-kernel Mosaic dynamic-gather / DMA gather is not portable here.
    _, idx = jax.lax.top_k(-d, k)                               # (B, N, K), self included
    g = jax.vmap(lambda cc, ii: cc[ii])(c, idx)                 # (B, N, K, Cout)
    if pool:
        return nbr_max_add_pool(a, g, tn=tm)                    # (B, Cout) pooled
    return nbr_max_add(a, g, tn=tm)                             # (B, N, Cout)


def split_edge_weight(w, b, cin, dtype=jnp.bfloat16):
    # w: (2*cin, cout) acting on [x_i, x_j - x_i]
    w_top, w_bot = w[:cin], w[cin:]
    return (w_top - w_bot).astype(dtype), w_bot.astype(dtype), b.astype(jnp.float32)


def dgcnn_forward(x, params, k, num_classes):
    x = x.astype(jnp.bfloat16)
    x1 = dynamic_edge_conv(x, *params["c1"], k)                  # (B, N, 64)
    x2 = dynamic_edge_conv(x1, *params["c2"], k)                 # (B, N, 128)
    pooled = dynamic_edge_conv(x2, *params["c3"], k, pool=True)  # (B, 256)
    return classifier_head(pooled, *params["f1"], *params["f2"], *params["f3"],
                           num_classes=num_classes)              # (B, num_classes)


# --------------------------------------------------------------------------- #
# Deterministic parameter init (PyTorch-style uniform(-1/sqrt(fan_in), 1/sqrt(fan_in)))
# --------------------------------------------------------------------------- #
def init_linear(key, fan_in, fan_out):
    kw, kb = jax.random.split(key)
    bound = 1.0 / (fan_in ** 0.5)
    w = jax.random.uniform(kw, (fan_in, fan_out), jnp.float32, -bound, bound)
    b = jax.random.uniform(kb, (1, fan_out), jnp.float32, -bound, bound)
    return w, b


if __name__ == "__main__":
    B, N, K, NUM_CLASSES = 2, 16, 4, 10                          # small shapes (k=4 vs 20)
    key = jax.random.PRNGKey(0)
    kx, k1, k2, k3, k4, k5, k6 = jax.random.split(key, 7)

    x = jax.random.normal(kx, (B, N, 3), jnp.float32)            # point cloud, channels-last

    w1c, b1c = init_linear(k1, 6, 64)
    w2c, b2c = init_linear(k2, 128, 128)
    w3c, b3c = init_linear(k3, 256, 256)
    wf1, bf1 = init_linear(k4, 256, 512)
    wf2, bf2 = init_linear(k5, 512, 256)
    wf3, bf3 = init_linear(k6, 256, NUM_CLASSES)

    # lane-pad the final classifier output to a multiple of 128 (dense stores);
    # logits are sliced back to num_classes in the wrapper.
    ncp = ((NUM_CLASSES + 127) // 128) * 128
    wf3p = jnp.zeros((256, ncp), jnp.float32).at[:, :NUM_CLASSES].set(wf3)
    bf3p = jnp.zeros((1, ncp), jnp.float32).at[:, :NUM_CLASSES].set(bf3)

    params = {
        "c1": split_edge_weight(w1c, b1c, 3),
        "c2": split_edge_weight(w2c, b2c, 64),
        "c3": split_edge_weight(w3c, b3c, 128),
        "f1": (wf1.astype(jnp.bfloat16), bf1),
        "f2": (wf2.astype(jnp.bfloat16), bf2),
        "f3": (wf3p.astype(jnp.bfloat16), bf3p),
    }

    out = dgcnn_forward(x, params, k=K, num_classes=NUM_CLASSES)
    out = jax.block_until_ready(out)
    assert out.shape == (B, NUM_CLASSES) and out.dtype == jnp.float32
    print("KERNEL_OK")
</pallas_src>

<mosaic_0001>
module attributes {stable_mosaic.version = 11 : i64} {
  func.func @_edgeconv_pre_kernel(%arg0: i32, %arg1: i32, %arg2: memref<1x16x3xbf16, #tpu.memory_space<vmem>>, %arg3: memref<1x16x3xbf16, #tpu.memory_space<vmem>>, %arg4: memref<3x64xbf16, #tpu.memory_space<vmem>>, %arg5: memref<3x64xbf16, #tpu.memory_space<vmem>>, %arg6: memref<1x64xf32, #tpu.memory_space<vmem>>, %arg7: memref<1x16x16xf32, #tpu.memory_space<vmem>>, %arg8: memref<1x16x64xbf16, #tpu.memory_space<vmem>>, %arg9: memref<1x16x64xbf16, #tpu.memory_space<vmem>>) attributes {dimension_semantics = [#tpu.dimension_semantics<parallel>, #tpu.dimension_semantics<parallel>], iteration_bounds = array<i64: 2, 1>, scalar_prefetch = 0 : i64, scratch_operands = 0 : i64, tpu.core_type = #tpu.core_type<tc>, window_params = [{transform_indices = @transform_0, window_bounds = array<i64: 1, 16, 3>}, {transform_indices = @transform_1, window_bounds = array<i64: 1, 16, 3>}, {pipeline_mode = #tpu.pipeline_mode<synchronous>, transform_indices = @transform_2, window_bounds = array<i64: 3, 64>}, {pipeline_mode = #tpu.pipeline_mode<synchronous>, transform_indices = @transform_3, window_bounds = array<i64: 3, 64>}, {pipeline_mode = #tpu.pipeline_mode<synchronous>, transform_indices = @transform_4, window_bounds = array<i64: 1, 64>}, {transform_indices = @transform_5, window_bounds = array<i64: 1, 16, 16>}, {transform_indices = @transform_6, window_bounds = array<i64: 1, 16, 64>}, {transform_indices = @transform_7, window_bounds = array<i64: 1, 16, 64>}]} {
    %c0 = arith.constant 0 : index
    %c0_0 = arith.constant 0 : index
    %c0_1 = arith.constant 0 : index
    %0 = vector.load %arg2[%c0, %c0_0, %c0_1] : memref<1x16x3xbf16, #tpu.memory_space<vmem>>, vector<1x16x3xbf16>
    %1 = vector.shape_cast %0 : vector<1x16x3xbf16> to vector<16x3xbf16>
    %c0_2 = arith.constant 0 : index
    %c0_3 = arith.constant 0 : index
    %c0_4 = arith.constant 0 : index
    %2 = vector.load %arg3[%c0_2, %c0_3, %c0_4] : memref<1x16x3xbf16, #tpu.memory_space<vmem>>, vector<1x16x3xbf16>
    %3 = vector.shape_cast %2 : vector<1x16x3xbf16> to vector<16x3xbf16>
    %4 = arith.extf %3 : vector<16x3xbf16> to vector<16x3xf32>
    %5 = arith.mulf %4, %4 : vector<16x3xf32>
    %cst = arith.constant dense<0.000000e+00> : vector<16xf32>
    %6 = vector.multi_reduction <add>, %5, %cst [1] : vector<16x3xf32> to vector<16xf32>
    %7 = vector.shape_cast %6 : vector<16xf32> to vector<16x1xf32>
    %cst_5 = arith.constant dense<0.000000e+00> : vector<16x16xf32>
    %8 = tpu.matmul %1, %3, %cst_5 {dimension_numbers = #tpu.dot_dimension_numbers<[1], [1], [0], [0], [0, 0, 1, 0], [], []>} : vector<16x3xbf16>, vector<16x3xbf16>, vector<16x16xf32> -> vector<16x16xf32>
    %9 = tpu.transpose %7, [1, 0] : vector<16x1xf32> -> vector<1x16xf32>
    %cst_6 = arith.constant 2.000000e+00 : f32
    %10 = vector.broadcast %cst_6 : f32 to vector<16x16xf32>
    %11 = arith.mulf %10, %8 : vector<16x16xf32>
    %12 = vector.broadcast %9 : vector<1x16xf32> to vector<16x16xf32>
    %13 = arith.subf %12, %11 : vector<16x16xf32>
    %c0_7 = arith.constant 0 : index
    %c0_8 = arith.constant 0 : index
    %c0_9 = arith.constant 0 : index
    %14 = vector.load %arg7[%c0_7, %c0_8, %c0_9] : memref<1x16x16xf32, #tpu.memory_space<vmem>>, vector<1x16x16xf32>
    %15 = vector.shape_cast %14 : vector<1x16x16xf32> to vector<16x16xf32>
    %16 = vector.shape_cast %13 : vector<16x16xf32> to vector<1x16x16xf32>
    tpu.vector_store %arg7[%c0_7, %c0_8, %c0_9], %16 {strides = array<i32>} : memref<1x16x16xf32, #tpu.memory_space<vmem>>, vector<1x16x16xf32>,
    %c0_10 = arith.constant 0 : index
    %c0_11 = arith.constant 0 : index
    %17 = vector.load %arg4[%c0_10, %c0_11] : memref<3x64xbf16, #tpu.memory_space<vmem>>, vector<3x64xbf16>
    %cst_12 = arith.constant dense<0.000000e+00> : vector<16x64xf32>
    %18 = tpu.matmul %1, %17, %cst_12 {dimension_numbers = #tpu.dot_dimension_numbers<[1], [0], [0], [1], [0, 0, 1, 1], [], []>} : vector<16x3xbf16>, vector<3x64xbf16>, vector<16x64xf32> -> vector<16x64xf32>
    %c0_13 = arith.constant 0 : index
    %c0_14 = arith.constant 0 : index
    %19 = vector.load %arg6[%c0_13, %c0_14] : memref<1x64xf32, #tpu.memory_space<vmem>>, vector<1x64xf32>
    %20 = vector.broadcast %19 : vector<1x64xf32> to vector<16x64xf32>
    %21 = arith.addf %18, %20 : vector<16x64xf32>
    %c0_15 = arith.constant 0 : index
    %c0_16 = arith.constant 0 : index
    %22 = vector.load %arg5[%c0_15, %c0_16] : memref<3x64xbf16, #tpu.memory_space<vmem>>, vector<3x64xbf16>
    %cst_17 = arith.constant dense<0.000000e+00> : vector<16x64xf32>
    %23 = tpu.matmul %1, %22, %cst_17 {dimension_numbers = #tpu.dot_dimension_numbers<[1], [0], [0], [1], [0, 0, 1, 1], [], []>} : vector<16x3xbf16>, vector<3x64xbf16>, vector<16x64xf32> -> vector<16x64xf32>
    %24 = arith.truncf %21 : vector<16x64xf32> to vector<16x64xbf16>
    %c0_18 = arith.constant 0 : index
    %c0_19 = arith.constant 0 : index
    %c0_20 = arith.constant 0 : index
    %25 = vector.load %arg8[%c0_18, %c0_19, %c0_20] : memref<1x16x64xbf16, #tpu.memory_space<vmem>>, vector<1x16x64xbf16>
    %26 = vector.shape_cast %25 : vector<1x16x64xbf16> to vector<16x64xbf16>
    %27 = vector.shape_cast %24 : vector<16x64xbf16> to vector<1x16x64xbf16>
    tpu.vector_store %arg8[%c0_18, %c0_19, %c0_20], %27 {strides = array<i32>} : memref<1x16x64xbf16, #tpu.memory_space<vmem>>, vector<1x16x64xbf16>,
    %28 = arith.truncf %23 : vector<16x64xf32> to vector<16x64xbf16>
    %c0_21 = arith.constant 0 : index
    %c0_22 = arith.constant 0 : index
    %c0_23 = arith.constant 0 : index
    %29 = vector.load %arg9[%c0_21, %c0_22, %c0_23] : memref<1x16x64xbf16, #tpu.memory_space<vmem>>, vector<1x16x64xbf16>
    %30 = vector.shape_cast %29 : vector<1x16x64xbf16> to vector<16x64xbf16>
    %31 = vector.shape_cast %28 : vector<16x64xbf16> to vector<1x16x64xbf16>
    tpu.vector_store %arg9[%c0_21, %c0_22, %c0_23], %31 {strides = array<i32>} : memref<1x16x64xbf16, #tpu.memory_space<vmem>>, vector<1x16x64xbf16>,
    return
  }
  func.func @transform_0(%arg0: i32, %arg1: i32) -> (i32, i32, i32) {
    %c0_i32 = arith.constant 0 : i32
    %c0_i32_0 = arith.constant 0 : i32
    return %arg0, %arg1, %c0_i32 : i32, i32, i32
  }
  func.func @transform_1(%arg0: i32, %arg1: i32) -> (i32, i32, i32) {
    %c0_i32 = arith.constant 0 : i32
    %c0_i32_0 = arith.constant 0 : i32
    %c0_i32_1 = arith.constant 0 : i32
    return %arg0, %c0_i32, %c0_i32_0 : i32, i32, i32
  }
  func.func @transform_2(%arg0: i32, %arg1: i32) -> (i32, i32) {
    %c0_i32 = arith.constant 0 : i32
    %c0_i32_0 = arith.constant 0 : i32
    %c0_i32_1 = arith.constant 0 : i32
    return %c0_i32, %c0_i32_0 : i32, i32
  }
  func.func @transform_3(%arg0: i32, %arg1: i32) -> (i32, i32) {
    %c0_i32 = arith.constant 0 : i32
    %c0_i32_0 = arith.constant 0 : i32
    %c0_i32_1 = arith.constant 0 : i32
    return %c0_i32, %c0_i32_0 : i32, i32
  }
  func.func @transform_4(%arg0: i32, %arg1: i32) -> (i32, i32) {
    %c0_i32 = arith.constant 0 : i32
    %c0_i32_0 = arith.constant 0 : i32
    %c0_i32_1 = arith.constant 0 : i32
    return %c0_i32, %c0_i32_0 : i32, i32
  }
  func.func @transform_5(%arg0: i32, %arg1: i32) -> (i32, i32, i32) {
    %c0_i32 = arith.constant 0 : i32
    %c0_i32_0 = arith.constant 0 : i32
    return %arg0, %arg1, %c0_i32 : i32, i32, i32
  }
  func.func @transform_6(%arg0: i32, %arg1: i32) -> (i32, i32, i32) {
    %c0_i32 = arith.constant 0 : i32
    %c0_i32_0 = arith.constant 0 : i32
    return %arg0, %arg1, %c0_i32 : i32, i32, i32
  }
  func.func @transform_7(%arg0: i32, %arg1: i32) -> (i32, i32, i32) {
    %c0_i32 = arith.constant 0 : i32
    %c0_i32_0 = arith.constant 0 : i32
    return %arg0, %arg1, %c0_i32 : i32, i32, i32
  }
}

</mosaic_0001>

<llo_original>
// kernel: tpu_custom_call.1
$region0: #{tpu_custom_call.1}
  #allocation0 [shape = 'u32[]', space=smem, size = 0x4, offset = 0x4, fixed_abs, tag = 'smem constant byte address 0x4 - core index']
  #allocation1 [shape = 'u32[144,128]{1,0:T(1,128)}', space=vmem, size = 0x12000, scoped, tag = 'internal scratch']
  %s0 = inlined_call_operand.vmem [shape: bf16[2,16,3], index: 0, kind: input, shape index: {}]
  %s1 = inlined_call_operand.vmem [shape: bf16[2,16,3], index: 1, kind: input, shape index: {}]
  %s2 = inlined_call_operand.vmem [shape: bf16[3,64], index: 2, kind: input, shape index: {}]
  %s3 = inlined_call_operand.vmem [shape: bf16[3,64], index: 3, kind: input, shape index: {}]
  %s4 = inlined_call_operand.vmem [shape: f32[1,64], index: 4, kind: input, shape index: {}]
  %s5 = inlined_call_operand.hbm [shape: f32[2,16,16], index: 5, kind: output, shape index: {0}]
  %s6 = inlined_call_operand.hbm [shape: bf16[2,16,64], index: 6, kind: output, shape index: {1}]
  %s7 = inlined_call_operand.hbm [shape: bf16[2,16,64], index: 7, kind: output, shape index: {2}]
  %8 = xla_tuple %s5, %s6, %s7
  %s9 = sld [smem:[#allocation0]]
  $region69: #{tpu_custom_call.1} parent=0
    _
  %s11 = ssub.s32 1, %s9
  %s12 = scalar_select 0, %s11, %s9
  $region1: #{tpu_custom_call.1} parent=0
    #allocation2 [shape = 'u8[16384]{0}', space=vmem, size = 0x4000, scoped, tag = 'output window, operand 0']
    #allocation3 [shape = 's32[2]{0}', space=sflag, size = 0x8, scoped, tag = 'scoped memory for tpu_custom_call.1']
    #allocation4 [shape = 'u8[8192]{0}', space=vmem, size = 0x2000, scoped, tag = 'output window, operand 1']
    #allocation5 [shape = 's32[2]{0}', space=sflag, size = 0x8, scoped, tag = 'scoped memory for tpu_custom_call.1']
    #allocation6 [shape = 'u8[8192]{0}', space=vmem, size = 0x2000, scoped, tag = 'output window, operand 2']
    %13 = vsyncpa [#allocation3], 0
    %s14 = scalar_lea.sflag [#allocation3], 1
    %15 = vsyncpa %s14, 0
    %16 = vsyncpa [#allocation5], 0
    %s17 = scalar_lea.sflag [#allocation5], 1
    %18 = vsyncpa %s17, 0
    loop: start=0, step=1, limit=4
    $region2: #{tpu_custom_call.1} parent=1 // loop_pre_header
      _
    $region3: #{tpu_custom_call.1} parent=1 // loop_header
      %s20 = sphi 0, %s24
      %p21 = scmp.ge.s32.totalorder %s20, 4
      %s27 = sphi 0, %s39
      %s28 = sphi 0, %s35
      %s29 = sphi 0, %s27
      %s30 = sphi 0, %s28
      %s31 = sphi 0, %s29
      %s32 = sphi 0, %s30
      %s44 = sphi 0, %s46
      %s47 = sphi 0, %s44
      %s48 = sphi 0, %s47
      %s64 = sphi 0, %s48
      %s70 = sphi 0, %s72
      %s73 = sphi 0, %s70
      %s74 = sphi 0, %s73
      %s90 = sphi 0, %s74
      %s94 = sphi 0, %s94
      %s96 = sphi 0, %s94
      %s97 = sphi 0, %s96
      %s111 = sphi 0, %s97
      %s115 = sphi 0, %s115
      %s117 = sphi 0, %s115
      %s118 = sphi 0, %s117
      %s132 = sphi 0, %s118
      %s136 = sphi 0, %s136
      %s138 = sphi 0, %s136
      %s139 = sphi 0, %s138
      %s153 = sphi 0, %s139
      %s161 = sphi 0, %s163
      %s164 = sphi 0, %s161
      %s165 = sphi 0, %s164
      %s181 = sphi 0, %s165
      %s189 = sphi 0, %s191
      %s192 = sphi 0, %s189
      %s193 = sphi 0, %s192
      %s209 = sphi 0, %s193
      %s217 = sphi 0, %s219
      %s220 = sphi 0, %s217
      %s221 = sphi 0, %s220
      %s237 = sphi 0, %s221
    $region4: #{tpu_custom_call.1} parent=1 // loop_header_branch
      %23 = sbr.rel (%p21) target = $region8
    $region5: #{tpu_custom_call.1} parent=1 // loop_body
      %s25 = ssub.s32 %s20, 1
      %s26 = ssub.s32 %s20, 2
      %s33 = sadd.s32 1, %s28
      %p34 = scmp.ge.s32.totalorder %s33, 1
      %s35 = scalar_select %p34, 0, %s33
      %s36 = sadd.s32 1, %s27
      %s37 = scalar_select %p34, %s36, %s27
      %p38 = scmp.ge.s32.totalorder %s37, 2
      %s39 = scalar_select %p38, 0, %s37
      %s40 = ssub.s32 %s27, %s39
      %s41 = ssub.s32 %s28, %s35
      %s42 = sor.u32 %s40, %s41
      %p43 = scmp.eq.s32.totalorder %s42, 0
      %s45 = sadd.s32 %s44, 1
      %s46 = scalar_select %p43, %s44, %s45
      %p49 = pneg %p43
      %p50 = scmp.eq.s32.totalorder %s20, 1
      %p51 = por %p49, %p50
      %p52 = scmp.ne.s32.totalorder %s44, %s47
      %p53 = scmp.eq.s32.totalorder %s20, 0
      %p54 = por %p52, %p53
      %p55 = scmp.ne.s32.totalorder %s44, %s47
      %p56 = scmp.eq.s32.totalorder %s25, 1
      %p57 = por %p55, %p56
      %p58 = scmp.ne.s32.totalorder %s47, %s48
      %p59 = scmp.eq.s32.totalorder %s25, 0
      %p60 = por %p58, %p59
      %p61 = scmp.ne.s32.totalorder %s47, %s48
      %p62 = scmp.eq.s32.totalorder %s26, 1
      %p63 = por %p61, %p62
      %p65 = scmp.ne.s32.totalorder %s48, %s64
      %p66 = scmp.eq.s32.totalorder %s26, 0
      %p67 = por %p65, %p66
      %s68 = ssub.s32 %s27, %s39
      %p69 = scmp.eq.s32.totalorder %s68, 0
      %s71 = sadd.s32 %s70, 1
      %s72 = scalar_select %p69, %s70, %s71
      %p75 = pneg %p69
      %p76 = scmp.eq.s32.totalorder %s20, 1
      %p77 = por %p75, %p76
      %p78 = scmp.ne.s32.totalorder %s70, %s73
      %p79 = scmp.eq.s32.totalorder %s20, 0
      %p80 = por %p78, %p79
      %p81 = scmp.ne.s32.totalorder %s70, %s73
      %p82 = scmp.eq.s32.totalorder %s25, 1
      %p83 = por %p81, %p82
      %p84 = scmp.ne.s32.totalorder %s73, %s74
      %p85 = scmp.eq.s32.totalorder %s25, 0
      %p86 = por %p84, %p85
      %p87 = scmp.ne.s32.totalorder %s73, %s74
      %p88 = scmp.eq.s32.totalorder %s26, 1
      %p89 = por %p87, %p88
      %p91 = scmp.ne.s32.totalorder %s74, %s90
      %p92 = scmp.eq.s32.totalorder %s26, 0
      %p93 = por %p91, %p92
      %s95 = sadd.s32 %s94, 1
      %p98 = scmp.eq.s32.totalorder %s20, 1
      %p99 = scmp.ne.s32.totalorder %s94, %s96
      %p100 = scmp.eq.s32.totalorder %s20, 0
      %p101 = por %p99, %p100
      %p102 = scmp.ne.s32.totalorder %s94, %s96
      %p103 = scmp.eq.s32.totalorder %s25, 1
      %p104 = por %p102, %p103
      %p105 = scmp.ne.s32.totalorder %s96, %s97
      %p106 = scmp.eq.s32.totalorder %s25, 0
      %p107 = por %p105, %p106
      %p108 = scmp.ne.s32.totalorder %s96, %s97
      %p109 = scmp.eq.s32.totalorder %s26, 1
      %p110 = por %p108, %p109
      %p112 = scmp.ne.s32.totalorder %s97, %s111
      %p113 = scmp.eq.s32.totalorder %s26, 0
      %p114 = por %p112, %p113
      %s116 = sadd.s32 %s115, 1
      %p119 = scmp.eq.s32.totalorder %s20, 1
      %p120 = scmp.ne.s32.totalorder %s115, %s117
      %p121 = scmp.eq.s32.totalorder %s20, 0
      %p122 = por %p120, %p121
      %p123 = scmp.ne.s32.totalorder %s115, %s117
      %p124 = scmp.eq.s32.totalorder %s25, 1
      %p125 = por %p123, %p124
      %p126 = scmp.ne.s32.totalorder %s117, %s118
      %p127 = scmp.eq.s32.totalorder %s25, 0
      %p128 = por %p126, %p127
      %p129 = scmp.ne.s32.totalorder %s117, %s118
      %p130 = scmp.eq.s32.totalorder %s26, 1
      %p131 = por %p129, %p130
      %p133 = scmp.ne.s32.totalorder %s118, %s132
      %p134 = scmp.eq.s32.totalorder %s26, 0
      %p135 = por %p133, %p134
      %s137 = sadd.s32 %s136, 1
      %p140 = scmp.eq.s32.totalorder %s20, 1
      %p141 = scmp.ne.s32.totalorder %s136, %s138
      %p142 = scmp.eq.s32.totalorder %s20, 0
      %p143 = por %p141, %p142
      %p144 = scmp.ne.s32.totalorder %s136, %s138
      %p145 = scmp.eq.s32.totalorder %s25, 1
      %p146 = por %p144, %p145
      %p147 = scmp.ne.s32.totalorder %s138, %s139
      %p148 = scmp.eq.s32.totalorder %s25, 0
      %p149 = por %p147, %p148
      %p150 = scmp.ne.s32.totalorder %s138, %s139
      %p151 = scmp.eq.s32.totalorder %s26, 1
      %p152 = por %p150, %p151
      %p154 = scmp.ne.s32.totalorder %s139, %s153
      %p155 = scmp.eq.s32.totalorder %s26, 0
      %p156 = por %p154, %p155
      %s157 = ssub.s32 %s27, %s39
      %s158 = ssub.s32 %s28, %s35
      %s159 = sor.u32 %s157, %s158
      %p160 = scmp.eq.s32.totalorder %s159, 0
      %s162 = sadd.s32 %s161, 1
      %s163 = scalar_select %p160, %s161, %s162
      %p166 = pneg %p160
      %p167 = scmp.eq.s32.totalorder %s20, 1
      %p168 = por %p166, %p167
      %p169 = scmp.ne.s32.totalorder %s161, %s164
      %p170 = scmp.eq.s32.totalorder %s20, 0
      %p171 = por %p169, %p170
      %p172 = scmp.ne.s32.totalorder %s161, %s164
      %p173 = scmp.eq.s32.totalorder %s25, 1
      %p174 = por %p172, %p173
      %p175 = scmp.ne.s32.totalorder %s164, %s165
      %p176 = scmp.eq.s32.totalorder %s25, 0
      %p177 = por %p175, %p176
      %p178 = scmp.ne.s32.totalorder %s164, %s165
      %p179 = scmp.eq.s32.totalorder %s26, 1
      %p180 = por %p178, %p179
      %p182 = scmp.ne.s32.totalorder %s165, %s181
      %p183 = scmp.eq.s32.totalorder %s26, 0
      %p184 = por %p182, %p183
      %s185 = ssub.s32 %s27, %s39
      %s186 = ssub.s32 %s28, %s35
      %s187 = sor.u32 %s185, %s186
      %p188 = scmp.eq.s32.totalorder %s187, 0
      %s190 = sadd.s32 %s189, 1
      %s191 = scalar_select %p188, %s189, %s190
      %p194 = pneg %p188
      %p195 = scmp.eq.s32.totalorder %s20, 1
      %p196 = por %p194, %p195
      %p197 = scmp.ne.s32.totalorder %s189, %s192
      %p198 = scmp.eq.s32.totalorder %s20, 0
      %p199 = por %p197, %p198
      %p200 = scmp.ne.s32.totalorder %s189, %s192
      %p201 = scmp.eq.s32.totalorder %s25, 1
      %p202 = por %p200, %p201
      %p203 = scmp.ne.s32.totalorder %s192, %s193
      %p204 = scmp.eq.s32.totalorder %s25, 0
      %p205 = por %p203, %p204
      %p206 = scmp.ne.s32.totalorder %s192, %s193
      %p207 = scmp.eq.s32.totalorder %s26, 1
      %p208 = por %p206, %p207
      %p210 = scmp.ne.s32.totalorder %s193, %s209
      %p211 = scmp.eq.s32.totalorder %s26, 0
      %p212 = por %p210, %p211
      %s213 = ssub.s32 %s27, %s39
      %s214 = ssub.s32 %s28, %s35
      %s215 = sor.u32 %s213, %s214
      %p216 = scmp.eq.s32.totalorder %s215, 0
      %s218 = sadd.s32 %s217, 1
      %s219 = scalar_select %p216, %s217, %s218
      %p222 = pneg %p216
      %p223 = scmp.eq.s32.totalorder %s20, 1
      %p224 = por %p222, %p223
      %p225 = scmp.ne.s32.totalorder %s217, %s220
      %p226 = scmp.eq.s32.totalorder %s20, 0
      %p227 = por %p225, %p226
      %p228 = scmp.ne.s32.totalorder %s217, %s220
      %p229 = scmp.eq.s32.totalorder %s25, 1
      %p230 = por %p228, %p229
      %p231 = scmp.ne.s32.totalorder %s220, %s221
      %p232 = scmp.eq.s32.totalorder %s25, 0
      %p233 = por %p231, %p232
      %p234 = scmp.ne.s32.totalorder %s220, %s221
      %p235 = scmp.eq.s32.totalorder %s26, 1
      %p236 = por %p234, %p235
      %p238 = scmp.ne.s32.totalorder %s221, %s237
      %p239 = scmp.eq.s32.totalorder %s26, 0
      %p240 = por %p238, %p239
      %p241 = scmp.le.s32.totalorder 1, %s20
      %p242 = scmp.lt.s32.totalorder %s20, 3
      %p243 = pnand %p241, %p242
      %p244 = pneg %p243
      // Predicated region
      $region9: #{tpu_custom_call.1} parent=5 // pred_check
        _
      $region10: #{tpu_custom_call.1} parent=5 // pred_check_branch
        %246 = sbr.rel (%p243) target = $region12
      $region11: #{tpu_custom_call.1} parent=5 // pred_region
        %s247 = ssub.s32 %s20, 1
        // Predicated region
        $region13: #{tpu_custom_call.1} parent=11 // pred_check
          %p248 = pneg %p107
        $region14: #{tpu_custom_call.1} parent=11 // pred_check_branch
          %250 = sbr.rel (%p248) target = $region16
        $region15: #{tpu_custom_call.1} parent=11 // pred_region
          _
        $region16: #{tpu_custom_call.1} parent=11 // pred_fallthru
          _
        // Predicated region
        $region17: #{tpu_custom_call.1} parent=11 // pred_check
          %p251 = pneg %p128
        $region18: #{tpu_custom_call.1} parent=11 // pred_check_branch
          %253 = sbr.rel (%p251) target = $region20
        $region19: #{tpu_custom_call.1} parent=11 // pred_region
          _
        $region20: #{tpu_custom_call.1} parent=11 // pred_fallthru
          _
        // Predicated region
        $region21: #{tpu_custom_call.1} parent=11 // pred_check
          %p254 = pneg %p149
        $region22: #{tpu_custom_call.1} parent=11 // pred_check_branch
          %256 = sbr.rel (%p254) target = $region24
        $region23: #{tpu_custom_call.1} parent=11 // pred_region
          _
        $region24: #{tpu_custom_call.1} parent=11 // pred_fallthru
          _
      $region12: #{tpu_custom_call.1} parent=5 // pred_fallthru
        _
      %p257 = scmp.lt.s32.totalorder %s20, 2
      // Predicated region
      $region25: #{tpu_custom_call.1} parent=5 // pred_check
        %p258 = pneg %p257
      $region26: #{tpu_custom_call.1} parent=5 // pred_check_branch
        %260 = sbr.rel (%p258) target = $region28
      $region27: #{tpu_custom_call.1} parent=5 // pred_region
        // Predicated region
        $region29: #{tpu_custom_call.1} parent=27 // pred_check
          %p261 = pneg %p54
        $region30: #{tpu_custom_call.1} parent=27 // pred_check_branch
          %263 = sbr.rel (%p261) target = $region32
        $region31: #{tpu_custom_call.1} parent=27 // pred_region
          %s264 = smul.u32 2, %s28
          %p265 = scmp.lt.s32.totalorder %s27, 1
          %s266 = scalar_select %p265, %s27, 1
          %p267 = scmp.lt.s32.totalorder %s264, 1
          %s268 = scalar_select %p267, %s264, 1
          %s269 = smul.addr %s266, 2
          %s270 = sadd.s32 %s268, %s269
          %s271 = smul.addr %s270, 4
          %s272 = scalar_lea.vmem %s0, %s271
          %s273 = smul.u32 2, %s28
        $region32: #{tpu_custom_call.1} parent=27 // pred_fallthru
          _
        // Predicated region
        $region33: #{tpu_custom_call.1} parent=27 // pred_check
          %p274 = pneg %p80
        $region34: #{tpu_custom_call.1} parent=27 // pred_check_branch
          %276 = sbr.rel (%p274) target = $region36
        $region35: #{tpu_custom_call.1} parent=27 // pred_region
          %p277 = scmp.lt.s32.totalorder %s27, 1
          %s278 = scalar_select %p277, %s27, 1
          %s279 = smul.addr %s278, 2
          %s280 = smul.addr %s279, 4
          %s281 = scalar_lea.vmem %s1, %s280
        $region36: #{tpu_custom_call.1} parent=27 // pred_fallthru
          _
      $region28: #{tpu_custom_call.1} parent=5 // pred_fallthru
        _
      %p282 = scmp.le.s32.totalorder 1, %s20
      %p283 = scmp.lt.s32.totalorder %s20, 3
      %p284 = pnand %p282, %p283
      %p285 = pneg %p284
      // Predicated region
      $region37: #{tpu_custom_call.1} parent=5 // pred_check
        _
      $region38: #{tpu_custom_call.1} parent=5 // pred_check_branch
        %287 = sbr.rel (%p284) target = $region40
      $region39: #{tpu_custom_call.1} parent=5 // pred_region
        %s288 = ssub.s32 %s20, 1
        %s289 = smul.u32 2, %s30
        %p290 = scmp.lt.s32.totalorder %s29, 1
        %s291 = scalar_select %p290, %s29, 1
        %p292 = scmp.lt.s32.totalorder %s289, 1
        %s293 = scalar_select %p292, %s289, 1
        %s294 = smul.addr %s291, 2
        %s295 = sadd.s32 %s293, %s294
        %s296 = smul.addr %s295, 4
        %s297 = scalar_lea.vmem %s0, %s296
        %p298 = pneg %p60
        %p299 = pneg %p57
        %p300 = scmp.lt.s32.totalorder %s29, 1
        %s301 = scalar_select %p300, %s29, 1
        %s302 = smul.addr %s301, 2
        %s303 = smul.addr %s302, 4
        %s304 = scalar_lea.vmem %s1, %s303
        %p305 = pneg %p86
        %p306 = pneg %p83
        %p307 = pneg %p107
        %p308 = pneg %p104
        %p309 = pneg %p128
        %p310 = pneg %p125
        %p311 = pneg %p149
        %p312 = pneg %p146
        %p313 = pneg %p177
        %p314 = pneg %p174
        %s315 = sand.u32 %s164, 1
        %s316 = scalar_lea.sflag [#allocation3], %s315
        %s317 = sand.u32 %s164, 1
        %s318 = smul.addr %s317, 16
        %s319 = scalar_lea.vmem [#allocation2], %s318
        %p320 = pneg %p205
        %p321 = pneg %p202
        %s322 = sand.u32 %s25, 1
        %s323 = scalar_lea.sflag [#allocation5], %s322
        %s324 = sand.u32 %s192, 1
        %s325 = smul.addr %s324, 8
        %s326 = scalar_lea.vmem [#allocation4], %s325
        %p327 = pneg %p233
        %p328 = pneg %p230
        %s329 = sand.u32 %s25, 1
        %s330 = scalar_lea.sflag [#allocation5], %s329
        %s331 = sand.u32 %s220, 1
        %s332 = smul.addr %s331, 8
        %s333 = scalar_lea.vmem [#allocation6], %s332
        %s334 = smul.u32 2, %s30
        %p335 = scmp.lt.s32.totalorder %s29, 1
        %s336 = scalar_select %p335, %s29, 1
        %p337 = scmp.lt.s32.totalorder %s334, 1
        %s338 = scalar_select %p337, %s334, 1
        %s339 = smul.addr %s336, 2
        %s340 = sadd.s32 %s338, %s339
        %s341 = smul.addr %s340, 4
        %s342 = scalar_lea.vmem %s0, %s341
        %s343 = smul.u32 2, %s30
        %p344 = scmp.lt.s32.totalorder %s29, 1
        %s345 = scalar_select %p344, %s29, 1
        %s346 = smul.addr %s345, 2
        %s347 = smul.addr %s346, 4
        %s348 = scalar_lea.vmem %s1, %s347
        %s349 = smul.u32 2, %s30
        %s350 = smul.u32 2, %s30
        %s351 = smul.u32 2, %s30
        %v353 = vld [vmem:[%s342] sm:$0xf]
        %v354 = vld [vmem:[%s342 + $0x4] sm:$0xf]
        %v355 = vld [vmem:[%s348] sm:$0xf]
        %v356 = vld [vmem:[%s348 + $0x4] sm:$0xf]
        %v357 = vunpack.c.l.bf16 %v355
        %v358 = vunpack.c.l.bf16 %v356
        %v359 = vmul.f32 %v357, %v357
        %v360 = vmul.f32 %v358, %v358
        %vm361 = vcmask 23552
        %v362 = vsel %vm361, %v359, 0.0
        %363 = vadd.xlane.f32.xlu0 %v362
        %v364 = vpop.xlane.xlu0 %363
        %v365 = vsel %vm361, %v360, 0.0
        %366 = vadd.xlane.f32.xlu0 %v365
        %v367 = vpop.xlane.xlu0 %366
        %v370 = vunpack.c.l.b16 %v353
        %v371 = vunpack.c.l.b16 %v354
        %v372 = vpack.c.b16 %v371, %v370
        %v375 = vunpack.c.l.b16 %v355
        %v376 = vunpack.c.l.b16 %v356
        %v377 = vpack.c.b16 %v376, %v375
        %v379 = vsel %vm361, %v372, 0
        %v382 = vsel %vm361, %v377, 0
        %384 = vmatprep.subr.bf16.mxu0 0
        %385 = vmatpush1.bf16.xpose.msra.mxu0 0
        %386 = vmatprep.subr.bf16.mxu0 0
        %387 = vmatpush1.bf16.xpose.msra.mxu0 0
        %388 = vmatprep.subr.bf16.mxu0 0
        %389 = vmatpush1.bf16.xpose.msra.mxu0 0
        %390 = vmatprep.subr.bf16.mxu0 0
        %391 = vmatpush1.bf16.xpose.msra.mxu0 0
        %392 = vmatprep.subr.bf16.mxu0 0
        %393 = vmatpush1.bf16.xpose.msra.mxu0 0
        %394 = vmatprep.subr.bf16.mxu0 0
        %395 = vmatpush1.bf16.xpose.msra.mxu0 0
        %396 = vmatprep.subr.bf16.mxu0 0
        %397 = vmatpush1.bf16.xpose.msra.mxu0 0
        %398 = vmatprep.subr.bf16.mxu0 0
        %399 = vmatpush1.bf16.xpose.msra.mxu0 %v382
        %400 = vmatprep.subr.bf16.mxu0 0
        %401 = vmatpush2.bf16.xpose.msra.mxu0 0
        %402 = vmatprep.subr.bf16.mxu0 0
        %403 = vmatpush2.bf16.xpose.msra.mxu0 0
        %404 = vmatprep.subr.bf16.mxu0 0
        %405 = vmatpush2.bf16.xpose.msra.mxu0 0
        %406 = vmatprep.subr.bf16.mxu0 0
        %407 = vmatpush2.bf16.xpose.msra.mxu0 0
        %408 = vmatprep.subr.bf16.mxu0 0
        %409 = vmatpush2.bf16.xpose.msra.mxu0 0
        %410 = vmatprep.subr.bf16.mxu0 0
        %411 = vmatpush2.bf16.xpose.msra.mxu0 0
        %412 = vmatprep.subr.bf16.mxu0 0
        %413 = vmatpush2.bf16.xpose.msra.mxu0 0
        %414 = vmatprep.subr.bf16.mxu0 0
        %415 = vmatpush2.bf16.xpose.msra.mxu0 0
        %416 = vmatprep.mubr.bf16.mxu0 0
        %417 = vmatmul.mubr.bf16.gmra.mxu0 %v379
        %v418 = vpop.f32.mrf.mxu0
        %v419 = vadd.f32 0.0, %v418
        %v420 = vpop.f32.mrf.mxu0
        %v421 = vpop.f32.mrf.mxu0
        %v422 = vadd.f32 0.0, %v421
        %v423 = vpop.f32.mrf.mxu0
        %424 = vdwg.mxu0
        %425 = vxpose.xlu0.b32.start [1/16] %v364, 128
        %426 = vxpose.xlu0.b32.cont [2/16] %v367, 128
        %427 = vxpose.xlu0.b32.cont [3/16] 0.0, 128
        %428 = vxpose.xlu0.b32.cont [4/16] 0.0, 128
        %429 = vxpose.xlu0.b32.cont [5/16] 0.0, 128
        %430 = vxpose.xlu0.b32.cont [6/16] 0.0, 128
        %431 = vxpose.xlu0.b32.cont [7/16] 0.0, 128
        %432 = vxpose.xlu0.b32.cont [8/16] 0.0, 128
        %433 = vxpose.xlu0.b32.cont [9/16] 0.0, 128
        %434 = vxpose.xlu0.b32.cont [10/16] 0.0, 128
        %435 = vxpose.xlu0.b32.cont [11/16] 0.0, 128
        %436 = vxpose.xlu0.b32.cont [12/16] 0.0, 128
        %437 = vxpose.xlu0.b32.cont [13/16] 0.0, 128
        %438 = vxpose.xlu0.b32.cont [14/16] 0.0, 128
        %439 = vxpose.xlu0.b32.cont [15/16] 0.0, 128
        %440 = vxpose.xlu0.b32.end [16/16] 0.0, 128
        %v441 = vpop.trf.xlu0
        %v442 = vpop.trf.xlu0
        %v443 = vpop.trf.xlu0
        %v444 = vpop.trf.xlu0
        %v445 = vpop.trf.xlu0
        %v446 = vpop.trf.xlu0
        %v447 = vpop.trf.xlu0
        %v448 = vpop.trf.xlu0
        %v449 = vpop.trf.xlu0
        %v450 = vpop.trf.xlu0
        %v451 = vpop.trf.xlu0
        %v452 = vpop.trf.xlu0
        %v453 = vpop.trf.xlu0
        %v454 = vpop.trf.xlu0
        %v455 = vpop.trf.xlu0
        %v456 = vpop.trf.xlu0
        %v457 = vmul.f32 %v419, 2.0
        %v458 = vmul.f32 %v422, 2.0
        %v459 = vlaneseq
        %v460 = vshrl.u32 %v459, 7
        %v461 = vsub.s32 0, %v460
        %v462 = vrot.slane %v441, %v461
        %v463 = vsub.f32 %v462, %v457
        %v464 = vsub.f32 %v462, %v458
        %vm465 = vcmask 130048
        %466 = vst.msk [vmem:[%s319] sm:$0xff] %vm465, %v463
        %467 = vst.msk [vmem:[%s319 + $0x8] sm:$0xff] %vm465, %v464
        %v468 = vld [vmem:[%s2] sm:$0x3]
        %v469 = vld [vmem:[%s4] sm:$0x1]
        %v471 = vlaneseq
        %v472 = vshrl.u32 %v471, 7
        %v473 = vsub.s32 0, %v472
        %v474 = vrot.slane %v469, %v473
        %vm476 = vcmask 1040384
        %vm477 = vcmask 1041408
        %v478 = vsel %vm476, 4294967295, 65535
        %v479 = vsel %vm477, %v478, 0
        %v481 = vand.u32 %v468, %v479
        %483 = vmatprep.subr.bf16.mxu0 0
        %484 = vmatpush1.bf16.msra.mxu0 0
        %485 = vmatprep.subr.bf16.mxu0 0
        %486 = vmatpush1.bf16.msra.mxu0 0
        %487 = vmatprep.subr.bf16.mxu0 0
        %488 = vmatpush1.bf16.msra.mxu0 0
        %489 = vmatprep.subr.bf16.mxu0 0
        %490 = vmatpush1.bf16.msra.mxu0 0
        %491 = vmatprep.subr.bf16.mxu0 0
        %492 = vmatpush1.bf16.msra.mxu0 0
        %493 = vmatprep.subr.bf16.mxu0 0
        %494 = vmatpush1.bf16.msra.mxu0 0
        %495 = vmatprep.subr.bf16.mxu0 0
        %496 = vmatpush1.bf16.msra.mxu0 0
        %497 = vmatprep.subr.bf16.mxu0 0
        %498 = vmatpush1.bf16.msra.mxu0 %v481
        %499 = vmatprep.subr.bf16.mxu0 0
        %500 = vmatpush2.bf16.msra.mxu0 0
        %501 = vmatprep.subr.bf16.mxu0 0
        %502 = vmatpush2.bf16.msra.mxu0 0
        %503 = vmatprep.subr.bf16.mxu0 0
        %504 = vmatpush2.bf16.msra.mxu0 0
        %505 = vmatprep.subr.bf16.mxu0 0
        %506 = vmatpush2.bf16.msra.mxu0 0
        %507 = vmatprep.subr.bf16.mxu0 0
        %508 = vmatpush2.bf16.msra.mxu0 0
        %509 = vmatprep.subr.bf16.mxu0 0
        %510 = vmatpush2.bf16.msra.mxu0 0
        %511 = vmatprep.subr.bf16.mxu0 0
        %512 = vmatpush2.bf16.msra.mxu0 0
        %513 = vmatprep.subr.bf16.mxu0 0
        %514 = vmatpush2.bf16.msra.mxu0 0
        %515 = vmatprep.mubr.bf16.mxu0 0
        %516 = vmatmul.mubr.bf16.gmra.mxu0 %v379
        %v517 = vpop.f32.mrf.mxu0
        %v518 = vadd.f32 %v474, %v517
        %v519 = vpop.f32.mrf.mxu0
        %v520 = vpop.f32.mrf.mxu0
        %v521 = vadd.f32 %v474, %v520
        %v522 = vpop.f32.mrf.mxu0
        %523 = vdwg.mxu0
        %v524 = vld [vmem:[%s3] sm:$0x3]
        %v526 = vand.u32 %v524, %v479
        %528 = vmatprep.subr.bf16.mxu0 0
        %529 = vmatpush1.bf16.msra.mxu0 0
        %530 = vmatprep.subr.bf16.mxu0 0
        %531 = vmatpush1.bf16.msra.mxu0 0
        %532 = vmatprep.subr.bf16.mxu0 0
        %533 = vmatpush1.bf16.msra.mxu0 0
        %534 = vmatprep.subr.bf16.mxu0 0
        %535 = vmatpush1.bf16.msra.mxu0 0
        %536 = vmatprep.subr.bf16.mxu0 0
        %537 = vmatpush1.bf16.msra.mxu0 0
        %538 = vmatprep.subr.bf16.mxu0 0
        %539 = vmatpush1.bf16.msra.mxu0 0
        %540 = vmatprep.subr.bf16.mxu0 0
        %541 = vmatpush1.bf16.msra.mxu0 0
        %542 = vmatprep.subr.bf16.mxu0 0
        %543 = vmatpush1.bf16.msra.mxu0 %v526
        %544 = vmatprep.subr.bf16.mxu0 0
        %545 = vmatpush2.bf16.msra.mxu0 0
        %546 = vmatprep.subr.bf16.mxu0 0
        %547 = vmatpush2.bf16.msra.mxu0 0
        %548 = vmatprep.subr.bf16.mxu0 0
        %549 = vmatpush2.bf16.msra.mxu0 0
        %550 = vmatprep.subr.bf16.mxu0 0
        %551 = vmatpush2.bf16.msra.mxu0 0
        %552 = vmatprep.subr.bf16.mxu0 0
        %553 = vmatpush2.bf16.msra.mxu0 0
        %554 = vmatprep.subr.bf16.mxu0 0
        %555 = vmatpush2.bf16.msra.mxu0 0
        %556 = vmatprep.subr.bf16.mxu0 0
        %557 = vmatpush2.bf16.msra.mxu0 0
        %558 = vmatprep.subr.bf16.mxu0 0
        %559 = vmatpush2.bf16.msra.mxu0 0
        %560 = vmatprep.mubr.bf16.mxu0 0
        %561 = vmatmul.mubr.bf16.gmra.mxu0 %v379
        %v562 = vpop.f32.mrf.mxu0
        %v563 = vadd.f32 0.0, %v562
        %v564 = vpop.f32.mrf.mxu0
        %v565 = vpop.f32.mrf.mxu0
        %v566 = vadd.f32 0.0, %v565
        %v567 = vpop.f32.mrf.mxu0
        %568 = vdwg.mxu0
        %v569 = vpack.c.bf16 %v521, %v518
        %v571 = vunpack.c.l.b16 %v569
        %v572 = vunpack.c.h.b16 %v569
        %v573 = vpack.c.b16 %v571, %v571
        %v574 = vpack.c.b16 %v572, %v572
        %vm577 = vcmask 519168
        %578 = vst.msk [vmem:[%s326] sm:$0xf] %vm577, %v573
        %579 = vst.msk [vmem:[%s326 + $0x4] sm:$0xf] %vm577, %v574
        %v580 = vpack.c.bf16 %v566, %v563
        %v582 = vunpack.c.l.b16 %v580
        %v583 = vunpack.c.h.b16 %v580
        %v584 = vpack.c.b16 %v582, %v582
        %v585 = vpack.c.b16 %v583, %v583
        %588 = vst.msk [vmem:[%s333] sm:$0xf] %vm577, %v584
        %589 = vst.msk [vmem:[%s333 + $0x4] sm:$0xf] %vm577, %v585
        %s590 = sand.u32 %s164, 1
        %s591 = scalar_lea.sflag [#allocation3], %s590
        %s592 = sand.u32 %s164, 1
        %s593 = smul.addr %s592, 16
        %s594 = scalar_lea.vmem [#allocation2], %s593
        %s595 = sand.u32 %s25, 1
        %s596 = scalar_lea.sflag [#allocation5], %s595
        %s597 = sand.u32 %s192, 1
        %s598 = smul.addr %s597, 8
        %s599 = scalar_lea.vmem [#allocation4], %s598
        %s600 = sand.u32 %s25, 1
        %s601 = scalar_lea.sflag [#allocation5], %s600
        %s602 = sand.u32 %s220, 1
        %s603 = smul.addr %s602, 8
        %s604 = scalar_lea.vmem [#allocation6], %s603
        // Predicated region
        $region41: #{tpu_custom_call.1} parent=39 // pred_check
          %p605 = pneg %p174
        $region42: #{tpu_custom_call.1} parent=39 // pred_check_branch
          %607 = sbr.rel (%p605) target = $region44
        $region43: #{tpu_custom_call.1} parent=39 // pred_region
          %s608 = smul.u32 2, %s30
          %s610 = ssub.s32 256, 256
          %611 = vsyncadd %s591, %s610
          %s612 = smul.addr %s29, 2
          %s613 = sadd.s32 %s608, %s612
          %s614 = smul.addr %s613, 128
          %s615 = scalar_lea.hbm %s5, %s614
          %s616 = sshll.u32 %s594, 4
          %s617 = int_to_ptr.vmem [resolvable:$true] %s616
          %622 = dma.vmem_to_hbm [thread:$0]  %s617, 256, %s615, %s591, 128, 128, 8
        $region44: #{tpu_custom_call.1} parent=39 // pred_fallthru
          _
        // Predicated region
        $region45: #{tpu_custom_call.1} parent=39 // pred_check
          %p623 = pneg %p202
        $region46: #{tpu_custom_call.1} parent=39 // pred_check_branch
          %625 = sbr.rel (%p623) target = $region48
        $region47: #{tpu_custom_call.1} parent=39 // pred_region
          %s626 = smul.u32 2, %s30
          %s628 = ssub.s32 128, 128
          %629 = vsyncadd %s596, %s628
          %s630 = smul.addr %s29, 2
          %s631 = sadd.s32 %s626, %s630
          %s632 = smul.addr %s631, 64
          %s633 = scalar_lea.hbm %s6, %s632
          %s634 = sshll.u32 %s599, 4
          %s635 = int_to_ptr.vmem [resolvable:$true] %s634
          %640 = dma.vmem_to_hbm [thread:$0]  %s635, 128, %s633, %s596, 64, 64, 4
        $region48: #{tpu_custom_call.1} parent=39 // pred_fallthru
          _
        // Predicated region
        $region49: #{tpu_custom_call.1} parent=39 // pred_check
          %p641 = pneg %p230
        $region50: #{tpu_custom_call.1} parent=39 // pred_check_branch
          %643 = sbr.rel (%p641) target = $region52
        $region51: #{tpu_custom_call.1} parent=39 // pred_region
          %s644 = smul.u32 2, %s30
          %s646 = ssub.s32 128, 128
          %647 = vsyncadd %s601, %s646
          %s648 = smul.addr %s29, 2
          %s649 = sadd.s32 %s644, %s648
          %s650 = smul.addr %s649, 64
          %s651 = scalar_lea.hbm %s7, %s650
          %s652 = sshll.u32 %s604, 4
          %s653 = int_to_ptr.vmem [resolvable:$true] %s652
          %658 = dma.vmem_to_hbm [thread:$0]  %s653, 128, %s651, %s601, 64, 64, 4
        $region52: #{tpu_custom_call.1} parent=39 // pred_fallthru
          _
      $region40: #{tpu_custom_call.1} parent=5 // pred_fallthru
        _
      %p659 = scmp.le.s32.totalorder 2, %s20
      // Predicated region
      $region53: #{tpu_custom_call.1} parent=5 // pred_check
        %p660 = pneg %p659
      $region54: #{tpu_custom_call.1} parent=5 // pred_check_branch
        %662 = sbr.rel (%p660) target = $region56
      $region55: #{tpu_custom_call.1} parent=5 // pred_region
        %s663 = ssub.s32 %s20, 2
        // Predicated region
        $region57: #{tpu_custom_call.1} parent=55 // pred_check
          %p664 = pneg %p180
        $region58: #{tpu_custom_call.1} parent=55 // pred_check_branch
          %666 = sbr.rel (%p664) target = $region60
        $region59: #{tpu_custom_call.1} parent=55 // pred_region
          %s667 = sand.u32 %s165, 1
          %s668 = scalar_lea.sflag [#allocation3], %s667
          %s669 = sand.u32 %s165, 1
          %s670 = smul.addr %s669, 16
          %s671 = scalar_lea.vmem [#allocation2], %s670
          %672 = dma.done %s668, 256
        $region60: #{tpu_custom_call.1} parent=55 // pred_fallthru
          _
        // Predicated region
        $region61: #{tpu_custom_call.1} parent=55 // pred_check
          %p673 = pneg %p208
        $region62: #{tpu_custom_call.1} parent=55 // pred_check_branch
          %675 = sbr.rel (%p673) target = $region64
        $region63: #{tpu_custom_call.1} parent=55 // pred_region
          %s676 = sand.u32 %s26, 1
          %s677 = scalar_lea.sflag [#allocation5], %s676
          %s678 = sand.u32 %s193, 1
          %s679 = smul.addr %s678, 8
          %s680 = scalar_lea.vmem [#allocation4], %s679
          %681 = dma.done %s677, 128
        $region64: #{tpu_custom_call.1} parent=55 // pred_fallthru
          _
        // Predicated region
        $region65: #{tpu_custom_call.1} parent=55 // pred_check
          %p682 = pneg %p236
        $region66: #{tpu_custom_call.1} parent=55 // pred_check_branch
          %684 = sbr.rel (%p682) target = $region68
        $region67: #{tpu_custom_call.1} parent=55 // pred_region
          %s685 = sand.u32 %s26, 1
          %s686 = scalar_lea.sflag [#allocation5], %s685
          %s687 = sand.u32 %s221, 1
          %s688 = smul.addr %s687, 8
          %s689 = scalar_lea.vmem [#allocation6], %s688
          %690 = dma.done %s686, 128
        $region68: #{tpu_custom_call.1} parent=55 // pred_fallthru
          _
      $region56: #{tpu_custom_call.1} parent=5 // pred_fallthru
        _
    $region6: #{tpu_custom_call.1} parent=1 // loop_footer
      %s24 = sadd.s32 1, %s20
    $region7: #{tpu_custom_call.1} parent=1 // loop_footer_branch
      %19 = sbr.rel target = $region3
    $region8: #{tpu_custom_call.1} parent=1 // loop_exit
      _
    %691 = vsyncpa [#allocation3], 1
    %s692 = scalar_lea.sflag [#allocation3], 1
    %693 = vsyncpa %s692, 1
    %694 = vsyncpa [#allocation5], 1
    %s695 = scalar_lea.sflag [#allocation5], 1
    %696 = vsyncpa %s695, 1

</llo_original>
